<compile_context>
chip_gen: v7x
topology: tpu7x:2x2x1
jax: 0.10.0
libtpu: 0.0.40
codegen_flags: <defaults>
</compile_context>

<pallas_src>
import functools

import jax
import jax.numpy as jnp
from jax import lax
from jax.experimental import pallas as pl
from jax.experimental.pallas import tpu as pltpu


def _round_up(x, m):
    return (x + m - 1) // m * m


# ------------------------------------------------------------- VMEM budgeting
def _limit_from_budget(budget, phys):
    # Scoped-VMEM limit passed to the compiler: comfortably above the target
    # footprint, capped below every generation's physical per-core VMEM.
    return int(min(56 << 20, phys, max(32 << 20, budget + (budget >> 1) + (8 << 20))))


def _vmem_budget_and_limit():
    """Generation-aware target pipeline footprint + explicit scoped-VMEM limit."""
    phys = 128 << 20                       # v5e / v6e per-core VMEM
    try:
        phys = int(pltpu.get_tpu_info().vmem_capacity_bytes)
    except Exception:
        pass                               # interpret mode / older jax: keep default
    # ~24 MiB on v7x (64 MiB VMEM/TC), 36 MiB on v5e/v6e (128 MiB).
    budget = min(int(phys * 0.375), 36 << 20)
    return budget, _limit_from_budget(budget, phys)


def _footprint_bytes(th, w, cin_p, cout):
    """Estimated VMEM footprint of one pipelined grid step of the fused kernel
    (double-buffered in/out tiles, lane-padded X tile, in-kernel y temporary)."""
    lane, sub = 128, 8
    cols = 4 * cout
    x_tile = _round_up(th * w, sub) * _round_up(cin_p, lane) * 4    # Cin pads to 128 lanes
    o_tile = th * 2 * _round_up(w, sub) * _round_up(2 * cout, lane) * 4
    y_tmp = _round_up(th * w, sub) * _round_up(cols, lane) * 4      # matmul result
    w_tile = _round_up(cin_p, sub) * _round_up(cols, lane) * 4
    vecs = 2 * sub * _round_up(cols, lane) * 4                      # scale + shift
    return 2 * (x_tile + o_tile + w_tile + vecs) + y_tmp


def _pick_th(nh, w, cin_p, cout, budget_bytes):
    """Rows of (n*h) per grid step.  Constraints / preferences:
       * th divides N*H; flattened X tile keeps 8-sublane alignment
         (th*w % 8 == 0) unless it is the full array;
       * estimated footprint (double buffering + lane padding) fits the budget;
       * >= 4 grid steps preferred (>= 2 when possible) so v7x's two
         TensorCores get work and the DMA pipeline stays full;
       * largest tile inside those constraints (HBM-roofline efficiency)."""
    feasible = []
    for th in range(1, nh + 1):
        if nh % th:
            continue
        aligned = ((th * w) % 8 == 0) or (th == nh)
        if aligned and _footprint_bytes(th, w, cin_p, cout) <= budget_bytes:
            feasible.append(th)
    if not feasible:
        return nh                                    # tiny problem: single block
    out_row_bytes = 2 * _round_up(w, 8) * _round_up(2 * cout, 128) * 4
    best = feasible[-1]
    for min_steps in (4, 2, 1):
        cand = [d for d in feasible if nh // d >= min_steps]
        if not cand:
            continue
        best = max(cand)
        # Accept fewer steps only when tiles would otherwise be too small to
        # amortize the ~0.35 us per-step overhead (tiny demo-sized problems).
        if best * out_row_bytes >= (128 << 10) or min_steps == 1:
            break
    return best


# -------------------------------------------------------------------- kernel
def _fused_deconv_bn_relu_kernel(x_ref, w_ref, scale_ref, shift_ref, o_ref, *,
                                 th, w, cout):
    """One pass: y = X @ W (256 columns, ordered (di, dj, c));
    out = relu(y*scale + shift), stored as (th, 2, w, 2*cout) whose row-major
    order is exactly NHWC (.., 2h+di, 2w+dj, c)."""
    c2 = 2 * cout
    y = jnp.dot(x_ref[...], w_ref[...], preferred_element_type=jnp.float32)
    y = jnp.maximum(y * scale_ref[...] + shift_ref[...], 0.0)
    # Slices at a 128-lane boundary (2*cout); reshape only splits sublanes.
    o_ref[:, 0, :, :] = y[:, :c2].reshape(th, w, c2)     # rows 2h
    o_ref[:, 1, :, :] = y[:, c2:].reshape(th, w, c2)     # rows 2h+1


# ------------------------------------------------------------------- wrapper
def block_forward(x_nchw, weight, bias, gamma, beta, eps=1e-5,
                  out_layout="NHWC", vmem_budget_bytes=None):
    """Forward pass of `block` (deconv k=2/s=2 + BatchNorm2d(train) + ReLU).

    x_nchw : (N, Cin, H, W) float32
    weight : (Cin, Cout, 2, 2)  PyTorch ConvTranspose2d layout
    bias, gamma, beta : (Cout,)
    out_layout : "NHWC" (fast path, (N, 2H, 2W, Cout)) or
                 "NCHW" (PyTorch parity, adds one XLA transpose).
    """
    n, cin, h, w = x_nchw.shape
    cin_w, cout, kh, kw = weight.shape
    assert cin_w == cin and kh == 2 and kw == 2, "only k=2, s=2, p=0 supported"
    assert out_layout in ("NHWC", "NCHW")

    cin_p = max(8, _round_up(cin, 8))      # sublane-friendly channel pad
    nh = n * h
    m = nh * w                             # matmul rows (input pixels)

    # NCHW -> flattened NHWC rows (n, h, w); zero-pad channels (exact math).
    x2 = jnp.transpose(x_nchw, (0, 2, 3, 1)).reshape(m, cin).astype(jnp.float32)
    if cin_p != cin:
        x2 = jnp.pad(x2, ((0, 0), (0, cin_p - cin)))

    # Weight as a single (Cin_p, 4*Cout) matrix, columns ordered (di, dj, c):
    #   w2[ci, (di*2 + dj)*Cout + co] = weight[ci, co, di, dj]
    w2 = jnp.transpose(weight, (0, 2, 3, 1)).astype(jnp.float32)   # (cin, 2, 2, cout)
    w2 = jnp.pad(w2, ((0, cin_p - cin), (0, 0), (0, 0), (0, 0)))
    w2 = w2.reshape(cin_p, 4 * cout)

    # ---- analytic BatchNorm statistics (training mode, biased variance).
    # X is tiny (Cin columns) -> plain jnp, CENTERED covariance (no E[X^2]-E[X]^2
    # cancellation).  Per matmul column j=(di,dj,c):
    #   mu_j  = xbar . w2[:, j] + bias_c
    #   var_j = w2[:, j]^T Cov(X) w2[:, j]           (>= 0)
    # Channel stats over the 4 equally-sized (di,dj) groups:
    #   mean_c = mean_j(mu_j)
    #   var_c  = mean_j(var_j) + mean_j((mu_j - mean_c)^2)   (all terms >= 0)
    mf = jnp.float32(m)
    xbar = jnp.mean(x2, axis=0)                                   # (cin_p,)
    xc = x2 - xbar
    cov = (xc.T @ xc) / mf                                        # (cin_p, cin_p)
    mu_col = xbar @ w2 + jnp.tile(bias, 4)                        # (4*cout,)
    var_col = jnp.sum(w2 * (cov @ w2), axis=0)                    # (4*cout,)
    mu4 = mu_col.reshape(4, cout)
    var4 = var_col.reshape(4, cout)
    mean_c = jnp.mean(mu4, axis=0)
    var_c = jnp.mean(var4, axis=0) + jnp.mean((mu4 - mean_c) ** 2, axis=0)
    var_c = jnp.maximum(var_c, 0.0)                               # rounding guard
    scale_c = gamma * lax.rsqrt(var_c + eps)
    shift_c = beta - mean_c * scale_c
    # Fold the deconv bias into the affine:  (Xw + b)*s + t = Xw*s + (b*s + t)
    scale_col = jnp.tile(scale_c, 4)[None, :]                     # (1, 4*cout)
    shift_col = jnp.tile(bias * scale_c + shift_c, 4)[None, :]    # (1, 4*cout)

    # ---- tile choice + explicit scoped-VMEM limit (generation-aware).
    if vmem_budget_bytes is None:
        budget, vmem_limit = _vmem_budget_and_limit()
    else:
        budget = int(vmem_budget_bytes)
        vmem_limit = _limit_from_budget(budget, 128 << 20)
    th = _pick_th(nh, w, cin_p, cout, budget)
    grid = (nh // th,)

    kern = functools.partial(_fused_deconv_bn_relu_kernel, th=th, w=w, cout=cout)
    flops = 2 * m * cin_p * 4 * cout + 3 * m * 4 * cout
    bytes_accessed = 4 * (m * cin_p + m * 4 * cout + cin_p * 4 * cout + 2 * 4 * cout)

    y5 = pl.pallas_call(
        kern,
        out_shape=jax.ShapeDtypeStruct((nh, 2, w, 2 * cout), jnp.float32),
        grid=grid,
        in_specs=[pl.BlockSpec((th * w, cin_p), lambda i: (i, 0)),
                  pl.BlockSpec((cin_p, 4 * cout), lambda i: (0, 0)),
                  pl.BlockSpec((1, 4 * cout), lambda i: (0, 0)),
                  pl.BlockSpec((1, 4 * cout), lambda i: (0, 0))],
        out_specs=pl.BlockSpec((th, 2, w, 2 * cout), lambda i: (i, 0, 0, 0)),
        compiler_params=pltpu.CompilerParams(
            dimension_semantics=("parallel",),
            vmem_limit_bytes=int(vmem_limit)),
        cost_estimate=pl.CostEstimate(flops=flops, transcendentals=0,
                                      bytes_accessed=bytes_accessed),
    )(x2, w2, scale_col, shift_col)

    # (N*H, 2, W, 2*Cout) row-major == NHWC (N, 2H, 2W, Cout): free reshape.
    out_nhwc = y5.reshape(n, 2 * h, 2 * w, cout)
    if out_layout == "NHWC":
        return out_nhwc
    # Optional strict PyTorch layout parity (full-tensor XLA transpose).
    return jnp.transpose(out_nhwc, (0, 3, 1, 2))


# ----------------------------------------------------------------- reference
def _reference(x, wt, b, gamma, beta, eps=1e-5):
    """Plain-JAX ConvTranspose2d(k=2,s=2,p=0) + BatchNorm2d(train) + ReLU (NCHW)."""
    t = jnp.einsum('nihw,iodj->nohdwj', x, wt)               # (N,Co,H,2,W,2)
    n_, co_, h_, _, w_, _ = t.shape
    y = t.reshape(n_, co_, 2 * h_, 2 * w_) + b[None, :, None, None]
    mean = y.mean(axis=(0, 2, 3), keepdims=True)
    var = y.var(axis=(0, 2, 3), keepdims=True)               # biased
    y = (y - mean) * lax.rsqrt(var + eps)
    y = y * gamma[None, :, None, None] + beta[None, :, None, None]
    return jnp.maximum(y, 0.0)


# ---------------------------------------------------------------------- main
if __name__ == "__main__":
    key = jax.random.PRNGKey(0)
    kx, kw_, kb, kg, kbe = jax.random.split(key, 5)

    N, Cin, H, W = 2, 4, 16, 16
    Cout = 64
    x = jax.random.normal(kx, (N, Cin, H, W), dtype=jnp.float32)
    weight = 0.05 * jax.random.uniform(kw_, (Cin, Cout, 2, 2), jnp.float32, -1.0, 1.0)
    bias = 0.05 * jax.random.uniform(kb, (Cout,), jnp.float32, -1.0, 1.0)
    gamma = 1.0 + 0.05 * jax.random.uniform(kg, (Cout,), jnp.float32, -1.0, 1.0)
    beta = 0.05 * jax.random.uniform(kbe, (Cout,), jnp.float32, -1.0, 1.0)

    ref = _reference(x, weight, bias, gamma, beta)            # NCHW reference

    # Primary (fast) path: NHWC output, no post-kernel layout pass.
    fwd_nhwc = jax.jit(functools.partial(block_forward, out_layout="NHWC"))
    out_nhwc = jax.block_until_ready(fwd_nhwc(x, weight, bias, gamma, beta))
    assert out_nhwc.shape == (N, 2 * H, 2 * W, Cout), out_nhwc.shape
    assert bool(jnp.all(jnp.isfinite(out_nhwc)))
    assert bool(jnp.all(out_nhwc >= 0.0))                     # final ReLU
    ref_nhwc = jnp.transpose(ref, (0, 2, 3, 1))
    assert bool(jnp.allclose(out_nhwc, ref_nhwc, atol=1e-3, rtol=1e-3)), (
        float(jnp.max(jnp.abs(out_nhwc - ref_nhwc))))

    # Compatibility path: exact PyTorch NCHW layout (adds one XLA transpose).
    fwd_nchw = jax.jit(functools.partial(block_forward, out_layout="NCHW"))
    out_nchw = jax.block_until_ready(fwd_nchw(x, weight, bias, gamma, beta))
    assert out_nchw.shape == (N, Cout, 2 * H, 2 * W), out_nchw.shape
    assert bool(jnp.allclose(out_nchw, ref, atol=1e-3, rtol=1e-3)), (
        float(jnp.max(jnp.abs(out_nchw - ref))))

    print("KERNEL_OK")
</pallas_src>

<mosaic_0001>
module attributes {stable_mosaic.version = 11 : i64} {
  func.func @_fused_deconv_bn_relu_kernel(%arg0: i32, %arg1: memref<128x8xf32, #tpu.memory_space<vmem>>, %arg2: memref<8x256xf32, #tpu.memory_space<vmem>>, %arg3: memref<1x256xf32, #tpu.memory_space<vmem>>, %arg4: memref<1x256xf32, #tpu.memory_space<vmem>>, %arg5: memref<8x2x16x128xf32, #tpu.memory_space<vmem>>) attributes {dimension_semantics = [#tpu.dimension_semantics<parallel>], iteration_bounds = array<i64: 4>, scalar_prefetch = 0 : i64, scratch_operands = 0 : i64, tpu.core_type = #tpu.core_type<tc>, window_params = [{transform_indices = @transform_0, window_bounds = array<i64: 128, 8>}, {pipeline_mode = #tpu.pipeline_mode<synchronous>, transform_indices = @transform_1, window_bounds = array<i64: 8, 256>}, {pipeline_mode = #tpu.pipeline_mode<synchronous>, transform_indices = @transform_2, window_bounds = array<i64: 1, 256>}, {pipeline_mode = #tpu.pipeline_mode<synchronous>, transform_indices = @transform_3, window_bounds = array<i64: 1, 256>}, {transform_indices = @transform_4, window_bounds = array<i64: 8, 2, 16, 128>}]} {
    %c0 = arith.constant 0 : index
    %c0_0 = arith.constant 0 : index
    %0 = vector.load %arg1[%c0, %c0_0] : memref<128x8xf32, #tpu.memory_space<vmem>>, vector<128x8xf32>
    %c0_1 = arith.constant 0 : index
    %c0_2 = arith.constant 0 : index
    %1 = vector.load %arg2[%c0_1, %c0_2] : memref<8x256xf32, #tpu.memory_space<vmem>>, vector<8x256xf32>
    %cst = arith.constant dense<0.000000e+00> : vector<128x256xf32>
    %2 = tpu.matmul %0, %1, %cst {dimension_numbers = #tpu.dot_dimension_numbers<[1], [0], [0], [1], [0, 0, 1, 1], [], []>} : vector<128x8xf32>, vector<8x256xf32>, vector<128x256xf32> -> vector<128x256xf32>
    %c0_3 = arith.constant 0 : index
    %c0_4 = arith.constant 0 : index
    %3 = vector.load %arg3[%c0_3, %c0_4] : memref<1x256xf32, #tpu.memory_space<vmem>>, vector<1x256xf32>
    %4 = vector.broadcast %3 : vector<1x256xf32> to vector<128x256xf32>
    %5 = arith.mulf %2, %4 : vector<128x256xf32>
    %c0_5 = arith.constant 0 : index
    %c0_6 = arith.constant 0 : index
    %6 = vector.load %arg4[%c0_5, %c0_6] : memref<1x256xf32, #tpu.memory_space<vmem>>, vector<1x256xf32>
    %7 = vector.broadcast %6 : vector<1x256xf32> to vector<128x256xf32>
    %8 = arith.addf %5, %7 : vector<128x256xf32>
    %cst_7 = arith.constant 0.000000e+00 : f32
    %9 = vector.broadcast %cst_7 : f32 to vector<128x256xf32>
    %10 = arith.maximumf %8, %9 : vector<128x256xf32>
    %11 = vector.extract_strided_slice %10 {offsets = [0, 0], sizes = [128, 128], strides = [1, 1]} : vector<128x256xf32> to vector<128x128xf32>
    %12 = vector.shape_cast %11 : vector<128x128xf32> to vector<8x16x128xf32>
    %c0_8 = arith.constant 0 : index
    %c0_9 = arith.constant 0 : index
    %c0_10 = arith.constant 0 : index
    %c0_11 = arith.constant 0 : index
    %13 = vector.load %arg5[%c0_8, %c0_9, %c0_10, %c0_11] : memref<8x2x16x128xf32, #tpu.memory_space<vmem>>, vector<8x1x16x128xf32>
    %14 = vector.shape_cast %13 : vector<8x1x16x128xf32> to vector<8x16x128xf32>
    %15 = vector.shape_cast %12 : vector<8x16x128xf32> to vector<8x1x16x128xf32>
    tpu.vector_store %arg5[%c0_8, %c0_9, %c0_10, %c0_11], %15 {strides = array<i32>} : memref<8x2x16x128xf32, #tpu.memory_space<vmem>>, vector<8x1x16x128xf32>,
    %16 = vector.extract_strided_slice %10 {offsets = [0, 128], sizes = [128, 128], strides = [1, 1]} : vector<128x256xf32> to vector<128x128xf32>
    %17 = vector.shape_cast %16 : vector<128x128xf32> to vector<8x16x128xf32>
    %c0_12 = arith.constant 0 : index
    %c1 = arith.constant 1 : index
    %c0_13 = arith.constant 0 : index
    %c0_14 = arith.constant 0 : index
    %18 = vector.load %arg5[%c0_12, %c1, %c0_13, %c0_14] : memref<8x2x16x128xf32, #tpu.memory_space<vmem>>, vector<8x1x16x128xf32>
    %19 = vector.shape_cast %18 : vector<8x1x16x128xf32> to vector<8x16x128xf32>
    %20 = vector.shape_cast %17 : vector<8x16x128xf32> to vector<8x1x16x128xf32>
    tpu.vector_store %arg5[%c0_12, %c1, %c0_13, %c0_14], %20 {strides = array<i32>} : memref<8x2x16x128xf32, #tpu.memory_space<vmem>>, vector<8x1x16x128xf32>,
    return
  }
  func.func @transform_0(%arg0: i32) -> (i32, i32) {
    %c0_i32 = arith.constant 0 : i32
    %c0_i32_0 = arith.constant 0 : i32
    return %arg0, %c0_i32 : i32, i32
  }
  func.func @transform_1(%arg0: i32) -> (i32, i32) {
    %c0_i32 = arith.constant 0 : i32
    %c0_i32_0 = arith.constant 0 : i32
    %c0_i32_1 = arith.constant 0 : i32
    return %c0_i32, %c0_i32_0 : i32, i32
  }
  func.func @transform_2(%arg0: i32) -> (i32, i32) {
    %c0_i32 = arith.constant 0 : i32
    %c0_i32_0 = arith.constant 0 : i32
    %c0_i32_1 = arith.constant 0 : i32
    return %c0_i32, %c0_i32_0 : i32, i32
  }
  func.func @transform_3(%arg0: i32) -> (i32, i32) {
    %c0_i32 = arith.constant 0 : i32
    %c0_i32_0 = arith.constant 0 : i32
    %c0_i32_1 = arith.constant 0 : i32
    return %c0_i32, %c0_i32_0 : i32, i32
  }
  func.func @transform_4(%arg0: i32) -> (i32, i32, i32, i32) {
    %c0_i32 = arith.constant 0 : i32
    %c0_i32_0 = arith.constant 0 : i32
    %c0_i32_1 = arith.constant 0 : i32
    %c0_i32_2 = arith.constant 0 : i32
    return %arg0, %c0_i32, %c0_i32_0, %c0_i32_1 : i32, i32, i32, i32
  }
}

</mosaic_0001>

<llo_original>
// kernel: tile.28
$region0: #{tile.28}
  #allocation0 [shape = 's32[1]{0}', space=sflag, size = 0x4, scoped, tag = 'scoped memory for tile.28']
  %s0 = inlined_call_operand.vmem [shape: f32[64], index: 0, kind: input, shape index: {}]
  %s1 = inlined_call_operand.vmem [shape: f32[4,64], index: 1, kind: output, shape index: {}]
  // Predicated region
  $region2: #{tile.28} parent=0 // pred_check
    _
  $region3: #{tile.28} parent=0 // pred_check_branch
    %3 = sbr.rel (0) target = $region5
  $region4: #{tile.28} parent=0 // pred_region
    _
  $region5: #{tile.28} parent=0 // pred_fallthru
    _
  %v4 = vld [vmem:[%s0] ss:$0 sm:$0xff]
  %5 = vst [vmem:[%s1] sm:$0xf] %v4

// kernel: tile.29
$region0: #{tile.29}
  %s0 = inlined_call_operand.vmem [shape: f32[4,64], index: 0, kind: input, shape index: {}]
  %s1 = inlined_call_operand.vmem [shape: f32[1,256], index: 1, kind: output, shape index: {}]
  $region1: #{tile.29} parent=0
    #allocation0 [shape = 'u8[8192]{0}', space=vmem, size = 0x2000, scoped, tag = 'scoped mem for output reshape']
    #allocation1 [shape = 'u8[4096]{0}', space=vmem, size = 0x1000, scoped, tag = 'scoped mem for input reshape']
    %s3 = sshllo.u32 0, 4
    %v4 = vld [vmem:[%s0] sm:%s3]
    %5 = vst [vmem:[#allocation1] sm:%s3] %v4
    %s6 = smov 3
    %v7 = vld [vmem:[#allocation1] ss:$2 sm:%s6]
    %vm8 = vcmask 523264
    %9 = vst.msk [vmem:[#allocation0] ss:$8 sm:$0x3] %vm8, %v7
    %s10 = scalar_lea.vmem [#allocation1], 1
    %s11 = smov 3
    %v12 = vld [vmem:[%s10] ss:$2 sm:%s11]
    %13 = vrot.lane.b32.xlu0 %v12, 64
    %v14 = vpop.permute.xlu0 %13
    %vm15 = vcmask 1048064
    %16 = vst.msk [vmem:[#allocation0] ss:$8 sm:$0x3] %vm15, %v14
    %s18 = sshllo.u32 0, 1
    %v20 = vld [vmem:[#allocation0] sm:%s18]
    %s21 = sshllo.u32 0, 1
    %22 = vst [vmem:[%s1] sm:%s21] %v20
    %s23 = scalar_lea.vmem [#allocation0], 8
    %v24 = vld [vmem:[%s23] sm:%s18]
    %s25 = sshllo.u32 0, 1
    %s26 = scalar_lea.vmem %s1, 1
    %27 = vst [vmem:[%s26] sm:%s25] %v24

// kernel: block_forward.1
$region0: #{block_forward.1}
  #allocation0 [shape = 'u32[]', space=smem, size = 0x4, offset = 0x4, fixed_abs, tag = 'smem constant byte address 0x4 - core index']
  #allocation1 [shape = 'u32[144,128]{1,0:T(1,128)}', space=vmem, size = 0x12000, scoped, tag = 'internal scratch']
  %s0 = inlined_call_operand.vmem [shape: f32[512,8], index: 0, kind: input, shape index: {}]
  %s1 = inlined_call_operand.vmem [shape: f32[8,256], index: 1, kind: input, shape index: {}]
  %s2 = inlined_call_operand.vmem [shape: f32[1,256], index: 2, kind: input, shape index: {}]
  %s3 = inlined_call_operand.vmem [shape: f32[1,256], index: 3, kind: input, shape index: {}]
  %s4 = inlined_call_operand.vmem [shape: f32[32,2,16,128], index: 4, kind: output, shape index: {}]
  %s5 = sld [smem:[#allocation0]]
  $region49: #{block_forward.1} parent=0
    _
  %s7 = ssub.s32 1, %s5
  %s8 = scalar_select 0, %s7, %s5
  loop: start=0, step=1, limit=6
  $region2: #{block_forward.1} parent=0 // loop_pre_header
    _
  $region3: #{block_forward.1} parent=0 // loop_header
    %s10 = sphi 0, %s14
    %p11 = scmp.ge.s32.totalorder %s10, 6
    %s20 = sphi 0, %s22
    %s23 = sphi 0, %s20
    %s24 = sphi 0, %s23
    %s40 = sphi 0, %s24
    %s44 = sphi 0, %s44
    %s46 = sphi 0, %s44
    %s47 = sphi 0, %s46
    %s61 = sphi 0, %s47
    %s65 = sphi 0, %s65
    %s67 = sphi 0, %s65
    %s68 = sphi 0, %s67
    %s82 = sphi 0, %s68
    %s86 = sphi 0, %s86
    %s88 = sphi 0, %s86
    %s89 = sphi 0, %s88
    %s103 = sphi 0, %s89
    %s109 = sphi 0, %s111
    %s112 = sphi 0, %s109
    %s113 = sphi 0, %s112
    %s129 = sphi 0, %s113
  $region4: #{block_forward.1} parent=0 // loop_header_branch
    %13 = sbr.rel (%p11) target = $region8
  $region5: #{block_forward.1} parent=0 // loop_body
    %s15 = ssub.s32 %s10, 1
    %s16 = ssub.s32 %s10, 2
    %s17 = sadd.s32 %s10, 1
    %s18 = ssub.s32 %s10, %s17
    %p19 = scmp.eq.s32.totalorder %s18, 0
    %s21 = sadd.s32 %s20, 1
    %s22 = scalar_select %p19, %s20, %s21
    %p25 = pneg %p19
    %p26 = scmp.eq.s32.totalorder %s10, 3
    %p27 = por %p25, %p26
    %p28 = scmp.ne.s32.totalorder %s20, %s23
    %p29 = scmp.eq.s32.totalorder %s10, 0
    %p30 = por %p28, %p29
    %p31 = scmp.ne.s32.totalorder %s20, %s23
    %p32 = scmp.eq.s32.totalorder %s15, 3
    %p33 = por %p31, %p32
    %p34 = scmp.ne.s32.totalorder %s23, %s24
    %p35 = scmp.eq.s32.totalorder %s15, 0
    %p36 = por %p34, %p35
    %p37 = scmp.ne.s32.totalorder %s23, %s24
    %p38 = scmp.eq.s32.totalorder %s16, 3
    %p39 = por %p37, %p38
    %p41 = scmp.ne.s32.totalorder %s24, %s40
    %p42 = scmp.eq.s32.totalorder %s16, 0
    %p43 = por %p41, %p42
    %s45 = sadd.s32 %s44, 1
    %p48 = scmp.eq.s32.totalorder %s10, 3
    %p49 = scmp.ne.s32.totalorder %s44, %s46
    %p50 = scmp.eq.s32.totalorder %s10, 0
    %p51 = por %p49, %p50
    %p52 = scmp.ne.s32.totalorder %s44, %s46
    %p53 = scmp.eq.s32.totalorder %s15, 3
    %p54 = por %p52, %p53
    %p55 = scmp.ne.s32.totalorder %s46, %s47
    %p56 = scmp.eq.s32.totalorder %s15, 0
    %p57 = por %p55, %p56
    %p58 = scmp.ne.s32.totalorder %s46, %s47
    %p59 = scmp.eq.s32.totalorder %s16, 3
    %p60 = por %p58, %p59
    %p62 = scmp.ne.s32.totalorder %s47, %s61
    %p63 = scmp.eq.s32.totalorder %s16, 0
    %p64 = por %p62, %p63
    %s66 = sadd.s32 %s65, 1
    %p69 = scmp.eq.s32.totalorder %s10, 3
    %p70 = scmp.ne.s32.totalorder %s65, %s67
    %p71 = scmp.eq.s32.totalorder %s10, 0
    %p72 = por %p70, %p71
    %p73 = scmp.ne.s32.totalorder %s65, %s67
    %p74 = scmp.eq.s32.totalorder %s15, 3
    %p75 = por %p73, %p74
    %p76 = scmp.ne.s32.totalorder %s67, %s68
    %p77 = scmp.eq.s32.totalorder %s15, 0
    %p78 = por %p76, %p77
    %p79 = scmp.ne.s32.totalorder %s67, %s68
    %p80 = scmp.eq.s32.totalorder %s16, 3
    %p81 = por %p79, %p80
    %p83 = scmp.ne.s32.totalorder %s68, %s82
    %p84 = scmp.eq.s32.totalorder %s16, 0
    %p85 = por %p83, %p84
    %s87 = sadd.s32 %s86, 1
    %p90 = scmp.eq.s32.totalorder %s10, 3
    %p91 = scmp.ne.s32.totalorder %s86, %s88
    %p92 = scmp.eq.s32.totalorder %s10, 0
    %p93 = por %p91, %p92
    %p94 = scmp.ne.s32.totalorder %s86, %s88
    %p95 = scmp.eq.s32.totalorder %s15, 3
    %p96 = por %p94, %p95
    %p97 = scmp.ne.s32.totalorder %s88, %s89
    %p98 = scmp.eq.s32.totalorder %s15, 0
    %p99 = por %p97, %p98
    %p100 = scmp.ne.s32.totalorder %s88, %s89
    %p101 = scmp.eq.s32.totalorder %s16, 3
    %p102 = por %p100, %p101
    %p104 = scmp.ne.s32.totalorder %s89, %s103
    %p105 = scmp.eq.s32.totalorder %s16, 0
    %p106 = por %p104, %p105
    %s107 = ssub.s32 %s10, %s17
    %p108 = scmp.eq.s32.totalorder %s107, 0
    %s110 = sadd.s32 %s109, 1
    %s111 = scalar_select %p108, %s109, %s110
    %p114 = pneg %p108
    %p115 = scmp.eq.s32.totalorder %s10, 3
    %p116 = por %p114, %p115
    %p117 = scmp.ne.s32.totalorder %s109, %s112
    %p118 = scmp.eq.s32.totalorder %s10, 0
    %p119 = por %p117, %p118
    %p120 = scmp.ne.s32.totalorder %s109, %s112
    %p121 = scmp.eq.s32.totalorder %s15, 3
    %p122 = por %p120, %p121
    %p123 = scmp.ne.s32.totalorder %s112, %s113
    %p124 = scmp.eq.s32.totalorder %s15, 0
    %p125 = por %p123, %p124
    %p126 = scmp.ne.s32.totalorder %s112, %s113
    %p127 = scmp.eq.s32.totalorder %s16, 3
    %p128 = por %p126, %p127
    %p130 = scmp.ne.s32.totalorder %s113, %s129
    %p131 = scmp.eq.s32.totalorder %s16, 0
    %p132 = por %p130, %p131
    %p133 = scmp.le.s32.totalorder 1, %s10
    %p134 = scmp.lt.s32.totalorder %s10, 5
    %p135 = pnand %p133, %p134
    %p136 = pneg %p135
    // Predicated region
    $region9: #{block_forward.1} parent=5 // pred_check
      _
    $region10: #{block_forward.1} parent=5 // pred_check_branch
      %138 = sbr.rel (%p135) target = $region12
    $region11: #{block_forward.1} parent=5 // pred_region
      %s139 = ssub.s32 %s10, 1
      // Predicated region
      $region13: #{block_forward.1} parent=11 // pred_check
        %p140 = pneg %p57
      $region14: #{block_forward.1} parent=11 // pred_check_branch
        %142 = sbr.rel (%p140) target = $region16
      $region15: #{block_forward.1} parent=11 // pred_region
        _
      $region16: #{block_forward.1} parent=11 // pred_fallthru
        _
      // Predicated region
      $region17: #{block_forward.1} parent=11 // pred_check
        %p143 = pneg %p78
      $region18: #{block_forward.1} parent=11 // pred_check_branch
        %145 = sbr.rel (%p143) target = $region20
      $region19: #{block_forward.1} parent=11 // pred_region
        _
      $region20: #{block_forward.1} parent=11 // pred_fallthru
        _
      // Predicated region
      $region21: #{block_forward.1} parent=11 // pred_check
        %p146 = pneg %p99
      $region22: #{block_forward.1} parent=11 // pred_check_branch
        %148 = sbr.rel (%p146) target = $region24
      $region23: #{block_forward.1} parent=11 // pred_region
        _
      $region24: #{block_forward.1} parent=11 // pred_fallthru
        _
    $region12: #{block_forward.1} parent=5 // pred_fallthru
      _
    %p149 = scmp.lt.s32.totalorder %s10, 4
    // Predicated region
    $region25: #{block_forward.1} parent=5 // pred_check
      %p150 = pneg %p149
    $region26: #{block_forward.1} parent=5 // pred_check_branch
      %152 = sbr.rel (%p150) target = $region28
    $region27: #{block_forward.1} parent=5 // pred_region
      // Predicated region
      $region29: #{block_forward.1} parent=27 // pred_check
        %p153 = pneg %p30
      $region30: #{block_forward.1} parent=27 // pred_check_branch
        %155 = sbr.rel (%p153) target = $region32
      $region31: #{block_forward.1} parent=27 // pred_region
        %s156 = smul.u32 16, %s10
        %p157 = scmp.lt.s32.totalorder %s156, 63
        %s158 = scalar_select %p157, %s156, 63
        %s159 = smul.addr %s158, 8
        %s160 = scalar_lea.vmem %s0, %s159
        %s161 = smul.u32 16, %s10
      $region32: #{block_forward.1} parent=27 // pred_fallthru
        _
    $region28: #{block_forward.1} parent=5 // pred_fallthru
      _
    %p162 = scmp.le.s32.totalorder 1, %s10
    %p163 = scmp.lt.s32.totalorder %s10, 5
    %p164 = pnand %p162, %p163
    %p165 = pneg %p164
    // Predicated region
    $region33: #{block_forward.1} parent=5 // pred_check
      _
    $region34: #{block_forward.1} parent=5 // pred_check_branch
      %167 = sbr.rel (%p164) target = $region36
    $region35: #{block_forward.1} parent=5 // pred_region
      %s168 = ssub.s32 %s10, 1
      %s169 = smul.u32 16, %s15
      %p170 = scmp.lt.s32.totalorder %s169, 63
      %s171 = scalar_select %p170, %s169, 63
      %s172 = smul.addr %s171, 8
      %s173 = scalar_lea.vmem %s0, %s172
      %p174 = pneg %p36
      %p175 = pneg %p33
      %p176 = pneg %p57
      %p177 = pneg %p54
      %p178 = pneg %p78
      %p179 = pneg %p75
      %p180 = pneg %p99
      %p181 = pneg %p96
      %p182 = pneg %p125
      %p183 = pneg %p122
      %s184 = smul.u32 8, %s15
      %p185 = scmp.lt.s32.totalorder %s184, 31
      %s186 = scalar_select %p185, %s184, 31
      %s187 = smul.addr %s186, 4
      %s188 = smul.addr %s187, 8
      %s189 = scalar_lea.vmem %s4, %s188
      %s190 = smul.u32 16, %s15
      %p191 = scmp.lt.s32.totalorder %s190, 63
      %s192 = scalar_select %p191, %s190, 63
      %s193 = smul.addr %s192, 8
      %s194 = scalar_lea.vmem %s0, %s193
      %s195 = smul.u32 16, %s15
      %s196 = smul.u32 8, %s15
      %p197 = scmp.lt.s32.totalorder %s196, 31
      %s198 = scalar_select %p197, %s196, 31
      %s199 = smul.addr %s198, 4
      %s200 = smul.addr %s199, 8
      %s201 = scalar_lea.vmem %s4, %s200
      %s202 = smul.u32 8, %s15
      %v203 = vld [vmem:[%s194] sm:$0xff]
      %v204 = vld [vmem:[%s194 + $0x8] sm:$0xff]
      %v205 = vld [vmem:[%s194 + $0x10] sm:$0xff]
      %v206 = vld [vmem:[%s194 + $0x18] sm:$0xff]
      %v207 = vld [vmem:[%s194 + $0x20] sm:$0xff]
      %v208 = vld [vmem:[%s194 + $0x28] sm:$0xff]
      %v209 = vld [vmem:[%s194 + $0x30] sm:$0xff]
      %v210 = vld [vmem:[%s194 + $0x38] sm:$0xff]
      %v211 = vld [vmem:[%s194 + $0x40] sm:$0xff]
      %v212 = vld [vmem:[%s194 + $0x48] sm:$0xff]
      %v213 = vld [vmem:[%s194 + $0x50] sm:$0xff]
      %v214 = vld [vmem:[%s194 + $0x58] sm:$0xff]
      %v215 = vld [vmem:[%s194 + $0x60] sm:$0xff]
      %v216 = vld [vmem:[%s194 + $0x68] sm:$0xff]
      %v217 = vld [vmem:[%s194 + $0x70] sm:$0xff]
      %v218 = vld [vmem:[%s194 + $0x78] sm:$0xff]
      %v219 = vld [vmem:[%s1] sm:$0xff]
      %v220 = vld [vmem:[%s1 + $0x8] sm:$0xff]
      %vm221 = vcmask 64512
      %v223 = vsel %vm221, %v203, 0
      %v226 = vsel %vm221, %v204, 0
      %v229 = vsel %vm221, %v205, 0
      %v232 = vsel %vm221, %v206, 0
      %v235 = vsel %vm221, %v207, 0
      %v238 = vsel %vm221, %v208, 0
      %v241 = vsel %vm221, %v209, 0
      %v244 = vsel %vm221, %v210, 0
      %v247 = vsel %vm221, %v211, 0
      %v250 = vsel %vm221, %v212, 0
      %v253 = vsel %vm221, %v213, 0
      %v256 = vsel %vm221, %v214, 0
      %v259 = vsel %vm221, %v215, 0
      %v262 = vsel %vm221, %v216, 0
      %v265 = vsel %vm221, %v217, 0
      %v268 = vsel %vm221, %v218, 0
      %270 = vmatprep.subr.mxu0 %v220
      %271 = vmatpush1.msra.mxu0 %v219
      %272 = vmatprep.subr.mxu0 0.0
      %273 = vmatpush1.msra.mxu0 0.0
      %274 = vmatprep.subr.mxu0 0.0
      %275 = vmatpush1.msra.mxu0 0.0
      %276 = vmatprep.subr.mxu0 0.0
      %277 = vmatpush1.msra.mxu0 0.0
      %278 = vmatprep.subr.mxu0 0.0
      %279 = vmatpush1.msra.mxu0 0.0
      %280 = vmatprep.subr.mxu0 0.0
      %281 = vmatpush1.msra.mxu0 0.0
      %282 = vmatprep.subr.mxu0 0.0
      %283 = vmatpush1.msra.mxu0 0.0
      %284 = vmatprep.subr.mxu0 0.0
      %285 = vmatpush1.msra.mxu0 0.0
      %286 = vmatprep.subr.mxu0 0.0
      %287 = vmatpush1.msra.mxu0 0.0
      %288 = vmatprep.subr.mxu0 0.0
      %289 = vmatpush1.msra.mxu0 0.0
      %290 = vmatprep.subr.mxu0 0.0
      %291 = vmatpush1.msra.mxu0 0.0
      %292 = vmatprep.subr.mxu0 0.0
      %293 = vmatpush1.msra.mxu0 0.0
      %294 = vmatprep.subr.mxu0 0.0
      %295 = vmatpush1.msra.mxu0 0.0
      %296 = vmatprep.subr.mxu0 0.0
      %297 = vmatpush1.msra.mxu0 0.0
      %298 = vmatprep.subr.mxu0 0.0
      %299 = vmatpush1.msra.mxu0 0.0
      %300 = vmatprep.subr.mxu0 0.0
      %301 = vmatpush1.msra.mxu0 0.0
      %302 = vmatprep.subr.mxu0 0.0
      %303 = vmatpush1.msra.mxu0 0.0
      %304 = vmatprep.subr.mxu0 0.0
      %305 = vmatpush1.msra.mxu0 0.0
      %306 = vmatprep.subr.mxu0 0.0
      %307 = vmatpush1.msra.mxu0 0.0
      %308 = vmatprep.subr.mxu0 0.0
      %309 = vmatpush1.msra.mxu0 0.0
      %310 = vmatprep.subr.mxu0 0.0
      %311 = vmatpush1.msra.mxu0 0.0
      %312 = vmatprep.subr.mxu0 0.0
      %313 = vmatpush1.msra.mxu0 0.0
      %314 = vmatprep.subr.mxu0 0.0
      %315 = vmatpush1.msra.mxu0 0.0
      %316 = vmatprep.subr.mxu0 0.0
      %317 = vmatpush1.msra.mxu0 0.0
      %318 = vmatprep.subr.mxu0 0.0
      %319 = vmatpush1.msra.mxu0 0.0
      %320 = vmatprep.subr.mxu0 0.0
      %321 = vmatpush1.msra.mxu0 0.0
      %322 = vmatprep.subr.mxu0 0.0
      %323 = vmatpush1.msra.mxu0 0.0
      %324 = vmatprep.subr.mxu0 0.0
      %325 = vmatpush1.msra.mxu0 0.0
      %326 = vmatprep.subr.mxu0 0.0
      %327 = vmatpush1.msra.mxu0 0.0
      %328 = vmatprep.subr.mxu0 0.0
      %329 = vmatpush1.msra.mxu0 0.0
      %330 = vmatprep.subr.mxu0 0.0
      %331 = vmatpush1.msra.mxu0 0.0
      %332 = vmatprep.subr.mxu0 0.0
      %333 = vmatpush1.msra.mxu0 0.0
      %334 = vmatprep.mubr.f32.mxu0 0.0
      %335 = vmatmul.mubr.f32.gmra.mrb[0].mxu0 %v223
      %v336 = vpop.f32.mrb[0].mxu0
      %v337 = vadd.f32 0.0, %v336
      %v338 = vpop.f32.mrb[0].mxu0
      %v339 = vadd.f32 0.0, %v338
      %340 = vmatprep.mubr.f32.mxu0 0.0
      %341 = vmatmul.mubr.f32.gmra.mrb[0].mxu0 %v226
      %v342 = vpop.f32.mrb[0].mxu0
      %v343 = vadd.f32 0.0, %v342
      %v344 = vpop.f32.mrb[0].mxu0
      %v345 = vadd.f32 0.0, %v344
      %346 = vmatprep.mubr.f32.mxu0 0.0
      %347 = vmatmul.mubr.f32.gmra.mrb[0].mxu0 %v229
      %v348 = vpop.f32.mrb[0].mxu0
      %v349 = vadd.f32 0.0, %v348
      %v350 = vpop.f32.mrb[0].mxu0
      %v351 = vadd.f32 0.0, %v350
      %352 = vmatprep.mubr.f32.mxu0 0.0
      %353 = vmatmul.mubr.f32.gmra.mrb[0].mxu0 %v232
      %v354 = vpop.f32.mrb[0].mxu0
      %v355 = vadd.f32 0.0, %v354
      %v356 = vpop.f32.mrb[0].mxu0
      %v357 = vadd.f32 0.0, %v356
      %358 = vmatprep.mubr.f32.mxu0 0.0
      %359 = vmatmul.mubr.f32.gmra.mrb[0].mxu0 %v235
      %v360 = vpop.f32.mrb[0].mxu0
      %v361 = vadd.f32 0.0, %v360
      %v362 = vpop.f32.mrb[0].mxu0
      %v363 = vadd.f32 0.0, %v362
      %364 = vmatprep.mubr.f32.mxu0 0.0
      %365 = vmatmul.mubr.f32.gmra.mrb[0].mxu0 %v238
      %v366 = vpop.f32.mrb[0].mxu0
      %v367 = vadd.f32 0.0, %v366
      %v368 = vpop.f32.mrb[0].mxu0
      %v369 = vadd.f32 0.0, %v368
      %370 = vmatprep.mubr.f32.mxu0 0.0
      %371 = vmatmul.mubr.f32.gmra.mrb[0].mxu0 %v241
      %v372 = vpop.f32.mrb[0].mxu0
      %v373 = vadd.f32 0.0, %v372
      %v374 = vpop.f32.mrb[0].mxu0
      %v375 = vadd.f32 0.0, %v374
      %376 = vmatprep.mubr.f32.mxu0 0.0
      %377 = vmatmul.mubr.f32.gmra.mrb[0].mxu0 %v244
      %v378 = vpop.f32.mrb[0].mxu0
      %v379 = vadd.f32 0.0, %v378
      %v380 = vpop.f32.mrb[0].mxu0
      %v381 = vadd.f32 0.0, %v380
      %382 = vmatprep.mubr.f32.mxu0 0.0
      %383 = vmatmul.mubr.f32.gmra.mrb[0].mxu0 %v247
      %v384 = vpop.f32.mrb[0].mxu0
      %v385 = vadd.f32 0.0, %v384
      %v386 = vpop.f32.mrb[0].mxu0
      %v387 = vadd.f32 0.0, %v386
      %388 = vmatprep.mubr.f32.mxu0 0.0
      %389 = vmatmul.mubr.f32.gmra.mrb[0].mxu0 %v250
      %v390 = vpop.f32.mrb[0].mxu0
      %v391 = vadd.f32 0.0, %v390
      %v392 = vpop.f32.mrb[0].mxu0
      %v393 = vadd.f32 0.0, %v392
      %394 = vmatprep.mubr.f32.mxu0 0.0
      %395 = vmatmul.mubr.f32.gmra.mrb[0].mxu0 %v253
      %v396 = vpop.f32.mrb[0].mxu0
      %v397 = vadd.f32 0.0, %v396
      %v398 = vpop.f32.mrb[0].mxu0
      %v399 = vadd.f32 0.0, %v398
      %400 = vmatprep.mubr.f32.mxu0 0.0
      %401 = vmatmul.mubr.f32.gmra.mrb[0].mxu0 %v256
      %v402 = vpop.f32.mrb[0].mxu0
      %v403 = vadd.f32 0.0, %v402
      %v404 = vpop.f32.mrb[0].mxu0
      %v405 = vadd.f32 0.0, %v404
      %406 = vmatprep.mubr.f32.mxu0 0.0
      %407 = vmatmul.mubr.f32.gmra.mrb[0].mxu0 %v259
      %v408 = vpop.f32.mrb[0].mxu0
      %v409 = vadd.f32 0.0, %v408
      %v410 = vpop.f32.mrb[0].mxu0
      %v411 = vadd.f32 0.0, %v410
      %412 = vmatprep.mubr.f32.mxu0 0.0
      %413 = vmatmul.mubr.f32.gmra.mrb[0].mxu0 %v262
      %v414 = vpop.f32.mrb[0].mxu0
      %v415 = vadd.f32 0.0, %v414
      %v416 = vpop.f32.mrb[0].mxu0
      %v417 = vadd.f32 0.0, %v416
      %418 = vmatprep.mubr.f32.mxu0 0.0
      %419 = vmatmul.mubr.f32.gmra.mrb[0].mxu0 %v265
      %v420 = vpop.f32.mrb[0].mxu0
      %v421 = vadd.f32 0.0, %v420
      %v422 = vpop.f32.mrb[0].mxu0
      %v423 = vadd.f32 0.0, %v422
      %424 = vmatprep.mubr.f32.mxu0 0.0
      %425 = vmatmul.mubr.f32.gmra.mrb[0].mxu0 %v268
      %v426 = vpop.f32.mrb[0].mxu0
      %v427 = vadd.f32 0.0, %v426
      %v428 = vpop.f32.mrb[0].mxu0
      %v429 = vadd.f32 0.0, %v428
      %430 = vdwg.mxu0
      %v431 = vld [vmem:[%s2] sm:$0x3]
      %v433 = vlaneseq
      %v434 = vshrl.u32 %v433, 7
      %v435 = vsub.s32 0, %v434
      %v436 = vrot.slane %v431, %v435
      %v437 = vlaneseq
      %v438 = vshrl.u32 %v437, 7
      %v439 = vsub.s32 1, %v438
      %v440 = vrot.slane %v431, %v439
      %v443 = vmul.f32 %v337, %v436
      %v444 = vmul.f32 %v339, %v440
      %v445 = vmul.f32 %v343, %v436
      %v446 = vmul.f32 %v345, %v440
      %v447 = vmul.f32 %v349, %v436
      %v448 = vmul.f32 %v351, %v440
      %v449 = vmul.f32 %v355, %v436
      %v450 = vmul.f32 %v357, %v440
      %v451 = vmul.f32 %v361, %v436
      %v452 = vmul.f32 %v363, %v440
      %v453 = vmul.f32 %v367, %v436
      %v454 = vmul.f32 %v369, %v440
      %v455 = vmul.f32 %v373, %v436
      %v456 = vmul.f32 %v375, %v440
      %v457 = vmul.f32 %v379, %v436
      %v458 = vmul.f32 %v381, %v440
      %v459 = vmul.f32 %v385, %v436
      %v460 = vmul.f32 %v387, %v440
      %v461 = vmul.f32 %v391, %v436
      %v462 = vmul.f32 %v393, %v440
      %v463 = vmul.f32 %v397, %v436
      %v464 = vmul.f32 %v399, %v440
      %v465 = vmul.f32 %v403, %v436
      %v466 = vmul.f32 %v405, %v440
      %v467 = vmul.f32 %v409, %v436
      %v468 = vmul.f32 %v411, %v440
      %v469 = vmul.f32 %v415, %v436
      %v470 = vmul.f32 %v417, %v440
      %v471 = vmul.f32 %v421, %v436
      %v472 = vmul.f32 %v423, %v440
      %v473 = vmul.f32 %v427, %v436
      %v474 = vmul.f32 %v429, %v440
      %v475 = vld [vmem:[%s3] sm:$0x3]
      %v477 = vlaneseq
      %v478 = vshrl.u32 %v477, 7
      %v479 = vsub.s32 0, %v478
      %v480 = vrot.slane %v475, %v479
      %v481 = vlaneseq
      %v482 = vshrl.u32 %v481, 7
      %v483 = vsub.s32 1, %v482
      %v484 = vrot.slane %v475, %v483
      %v487 = vadd.f32 %v443, %v480
      %v488 = vadd.f32 %v444, %v484
      %v489 = vadd.f32 %v445, %v480
      %v490 = vadd.f32 %v446, %v484
      %v491 = vadd.f32 %v447, %v480
      %v492 = vadd.f32 %v448, %v484
      %v493 = vadd.f32 %v449, %v480
      %v494 = vadd.f32 %v450, %v484
      %v495 = vadd.f32 %v451, %v480
      %v496 = vadd.f32 %v452, %v484
      %v497 = vadd.f32 %v453, %v480
      %v498 = vadd.f32 %v454, %v484
      %v499 = vadd.f32 %v455, %v480
      %v500 = vadd.f32 %v456, %v484
      %v501 = vadd.f32 %v457, %v480
      %v502 = vadd.f32 %v458, %v484
      %v503 = vadd.f32 %v459, %v480
      %v504 = vadd.f32 %v460, %v484
      %v505 = vadd.f32 %v461, %v480
      %v506 = vadd.f32 %v462, %v484
      %v507 = vadd.f32 %v463, %v480
      %v508 = vadd.f32 %v464, %v484
      %v509 = vadd.f32 %v465, %v480
      %v510 = vadd.f32 %v466, %v484
      %v511 = vadd.f32 %v467, %v480
      %v512 = vadd.f32 %v468, %v484
      %v513 = vadd.f32 %v469, %v480
      %v514 = vadd.f32 %v470, %v484
      %v515 = vadd.f32 %v471, %v480
      %v516 = vadd.f32 %v472, %v484
      %v517 = vadd.f32 %v473, %v480
      %v518 = vadd.f32 %v474, %v484
      %v519 = vmax.f32 %v487, 0.0
      %v520 = vmax.f32 %v488, 0.0
      %v521 = vmax.f32 %v489, 0.0
      %v522 = vmax.f32 %v490, 0.0
      %v523 = vmax.f32 %v491, 0.0
      %v524 = vmax.f32 %v492, 0.0
      %v525 = vmax.f32 %v493, 0.0
      %v526 = vmax.f32 %v494, 0.0
      %v527 = vmax.f32 %v495, 0.0
      %v528 = vmax.f32 %v496, 0.0
      %v529 = vmax.f32 %v497, 0.0
      %v530 = vmax.f32 %v498, 0.0
      %v531 = vmax.f32 %v499, 0.0
      %v532 = vmax.f32 %v500, 0.0
      %v533 = vmax.f32 %v501, 0.0
      %v534 = vmax.f32 %v502, 0.0
      %v535 = vmax.f32 %v503, 0.0
      %v536 = vmax.f32 %v504, 0.0
      %v537 = vmax.f32 %v505, 0.0
      %v538 = vmax.f32 %v506, 0.0
      %v539 = vmax.f32 %v507, 0.0
      %v540 = vmax.f32 %v508, 0.0
      %v541 = vmax.f32 %v509, 0.0
      %v542 = vmax.f32 %v510, 0.0
      %v543 = vmax.f32 %v511, 0.0
      %v544 = vmax.f32 %v512, 0.0
      %v545 = vmax.f32 %v513, 0.0
      %v546 = vmax.f32 %v514, 0.0
      %v547 = vmax.f32 %v515, 0.0
      %v548 = vmax.f32 %v516, 0.0
      %v549 = vmax.f32 %v517, 0.0
      %v550 = vmax.f32 %v518, 0.0
      %551 = vst [vmem:[%s201] sm:$0xff] %v519
      %552 = vst [vmem:[%s201 + $0x8] sm:$0xff] %v521
      %553 = vst [vmem:[%s201 + $0x20] sm:$0xff] %v523
      %554 = vst [vmem:[%s201 + $0x28] sm:$0xff] %v525
      %555 = vst [vmem:[%s201 + $0x40] sm:$0xff] %v527
      %556 = vst [vmem:[%s201 + $0x48] sm:$0xff] %v529
      %557 = vst [vmem:[%s201 + $0x60] sm:$0xff] %v531
      %558 = vst [vmem:[%s201 + $0x68] sm:$0xff] %v533
      %559 = vst [vmem:[%s201 + $0x80] sm:$0xff] %v535
      %560 = vst [vmem:[%s201 + $0x88] sm:$0xff] %v537
      %561 = vst [vmem:[%s201 + $0xa0] sm:$0xff] %v539
      %562 = vst [vmem:[%s201 + $0xa8] sm:$0xff] %v541
      %563 = vst [vmem:[%s201 + $0xc0] sm:$0xff] %v543
      %564 = vst [vmem:[%s201 + $0xc8] sm:$0xff] %v545
      %565 = vst [vmem:[%s201 + $0xe0] sm:$0xff] %v547
      %566 = vst [vmem:[%s201 + $0xe8] sm:$0xff] %v549
      %s567 = scalar_lea.vmem %s201, 16
      %568 = vst [vmem:[%s567] sm:$0xff] %v520
      %569 = vst [vmem:[%s567 + $0x8] sm:$0xff] %v522
      %570 = vst [vmem:[%s567 + $0x20] sm:$0xff] %v524
      %571 = vst [vmem:[%s567 + $0x28] sm:$0xff] %v526
      %572 = vst [vmem:[%s567 + $0x40] sm:$0xff] %v528
      %573 = vst [vmem:[%s567 + $0x48] sm:$0xff] %v530
      %574 = vst [vmem:[%s567 + $0x60] sm:$0xff] %v532
      %575 = vst [vmem:[%s567 + $0x68] sm:$0xff] %v534
      %576 = vst [vmem:[%s567 + $0x80] sm:$0xff] %v536
      %577 = vst [vmem:[%s567 + $0x88] sm:$0xff] %v538
      %578 = vst [vmem:[%s567 + $0xa0] sm:$0xff] %v540
      %579 = vst [vmem:[%s567 + $0xa8] sm:$0xff] %v542
      %580 = vst [vmem:[%s567 + $0xc0] sm:$0xff] %v544
      %581 = vst [vmem:[%s567 + $0xc8] sm:$0xff] %v546
      %582 = vst [vmem:[%s567 + $0xe0] sm:$0xff] %v548
      %583 = vst [vmem:[%s567 + $0xe8] sm:$0xff] %v550
      %s584 = smul.u32 8, %s15
      %p585 = scmp.lt.s32.totalorder %s584, 31
      %s586 = scalar_select %p585, %s584, 31
      %s587 = smul.addr %s586, 4
      %s588 = smul.addr %s587, 8
      %s589 = scalar_lea.vmem %s4, %s588
      // Predicated region
      $region37: #{block_forward.1} parent=35 // pred_check
        %p590 = pneg %p122
      $region38: #{block_forward.1} parent=35 // pred_check_branch
        %592 = sbr.rel (%p590) target = $region40
      $region39: #{block_forward.1} parent=35 // pred_region
        %s593 = smul.u32 8, %s15
      $region40: #{block_forward.1} parent=35 // pred_fallthru
        _
    $region36: #{block_forward.1} parent=5 // pred_fallthru
      _
    %p594 = scmp.le.s32.totalorder 2, %s10
    // Predicated region
    $region41: #{block_forward.1} parent=5 // pred_check
      %p595 = pneg %p594
    $region42: #{block_forward.1} parent=5 // pred_check_branch
      %597 = sbr.rel (%p595) target = $region44
    $region43: #{block_forward.1} parent=5 // pred_region
      %s598 = ssub.s32 %s10, 2
      // Predicated region
      $region45: #{block_forward.1} parent=43 // pred_check
        %p599 = pneg %p128
      $region46: #{block_forward.1} parent=43 // pred_check_branch
        %601 = sbr.rel (%p599) target = $region48
      $region47: #{block_forward.1} parent=43 // pred_region
        %s602 = smul.u32 8, %s16
        %p603 = scmp.lt.s32.totalorder %s602, 31
        %s604 = scalar_select %p603, %s602, 31
        %s605 = smul.addr %s604, 4
        %s606 = smul.addr %s605, 8
        %s607 = scalar_lea.vmem %s4, %s606
      $region48: #{block_forward.1} parent=43 // pred_fallthru
        _
    $region44: #{block_forward.1} parent=5 // pred_fallthru
      _
  $region6: #{block_forward.1} parent=0 // loop_footer
    %s14 = sadd.s32 1, %s10
  $region7: #{block_forward.1} parent=0 // loop_footer_branch
    %9 = sbr.rel target = $region3
  $region8: #{block_forward.1} parent=0 // loop_exit
    _

</llo_original>
